<compile_context>
chip_gen: v7x
topology: tpu7x:2x2x1
jax: 0.10.0
libtpu: 0.0.40
codegen_flags: <defaults>
</compile_context>

<pallas_src>
import jax
import jax.numpy as jnp
from jax.experimental import pallas as pl
from jax.experimental.pallas import tpu as pltpu


def _round_up(x, m):
    return ((x + m - 1) // m) * m


def _vmem_budget_bytes(frac=0.70, fallback=40 * 1024 * 1024):
    """~70% of this generation's VMEM (v7x: ~45 MiB, v5e/v6e: ~90 MiB)."""
    try:
        cap = pltpu.get_tpu_info().vmem_capacity_bytes
        return int(cap * frac)
    except Exception:
        return fallback


def _choose_entity_tile(n_entities, rank, tb, q_bytes, rhs_bytes, out_bytes,
                        vmem_budget_bytes, tn_max=8192):
    """Largest multiple of 128 along the entity axis fitting the VMEM budget."""
    tn = min(tn_max, _round_up(n_entities, 128))
    tn = max(128, (tn // 128) * 128)

    def footprint(t):  # double-buffered q tile / rhs tile / out tile
        return 2 * (tb * rank * q_bytes + rank * t * rhs_bytes + tb * t * out_bytes)

    while tn > 128 and footprint(tn) > vmem_budget_bytes:
        tn -= 128
    return tn


def _cp_score_kernel(q_ref, rhs_ref, o_ref):
    # q_ref   : [tb, R]  query tile  (q = lhs*rel, precomputed in the wrapper)
    # rhs_ref : [R, tn]  pre-transposed rhs-table tile (lane-dense along tn)
    # o_ref   : [tb, tn] score tile
    o_ref[...] = jnp.dot(
        q_ref[...], rhs_ref[...], preferred_element_type=jnp.float32
    ).astype(o_ref.dtype)


def cp_scores(q, rhs_t_padded, *, n_entities, tn, tb_max=256,
              out_dtype=jnp.bfloat16, vmem_limit_bytes=None):
    """scores = q @ rhs_t.

    q            : [B, R]      (= lhs*rel), typically bf16
    rhs_t_padded : [R, N_pad]  pre-transposed table, N_pad a multiple of tn (padded at init)
    returns      : [B, n_entities] in out_dtype
    """
    B, R = q.shape
    R2, N_pad = rhs_t_padded.shape
    assert R2 == R, "rank mismatch between query and rhs table"
    assert N_pad % tn == 0, "rhs table must be pre-padded to a multiple of the entity tile"

    # ---- batch tile: multiple of 16 (bf16 sublane packing) -----------------------
    tb = min(tb_max, _round_up(B, 16))
    B_pad = _round_up(B, tb)
    if B_pad != B:
        q = jnp.pad(q, ((0, B_pad - B), (0, 0)))

    n_n = N_pad // tn
    n_b = B_pad // tb
    # Entity tiles OUTER (leading parallel axis -> megacore split on v7x), batch tiles
    # INNER (fastest varying) -> rhs tile block index is constant across the inner loop
    # so the [R, N] table is DMA'd from HBM exactly once.
    grid = (n_n, n_b)

    q_bytes = q.dtype.itemsize
    rhs_bytes = rhs_t_padded.dtype.itemsize
    out_bytes = jnp.dtype(out_dtype).itemsize

    cost = pl.CostEstimate(
        flops=2 * B_pad * R * N_pad,
        transcendentals=0,
        bytes_accessed=(R * N_pad * rhs_bytes          # rhs table streamed once
                        + n_n * B_pad * R * q_bytes    # q re-streamed per entity tile
                        + B_pad * N_pad * out_bytes),  # output written once
    )

    if vmem_limit_bytes is None:
        vmem_limit_bytes = _vmem_budget_bytes()

    out = pl.pallas_call(
        _cp_score_kernel,
        out_shape=jax.ShapeDtypeStruct((B_pad, N_pad), out_dtype),
        grid_spec=pltpu.PrefetchScalarGridSpec(
            num_scalar_prefetch=0,
            grid=grid,
            in_specs=[
                pl.BlockSpec((tb, R), lambda j, i: (i, 0)),   # query tile (inner axis only)
                pl.BlockSpec((R, tn), lambda j, i: (0, j)),   # rhs tile   (outer axis only)
            ],
            out_specs=pl.BlockSpec((tb, tn), lambda j, i: (i, j)),
        ),
        compiler_params=pltpu.CompilerParams(
            dimension_semantics=("parallel", "parallel"),
            vmem_limit_bytes=vmem_limit_bytes,
        ),
        cost_estimate=cost,
    )(q, rhs_t_padded)

    if B_pad != B or N_pad != n_entities:
        out = out[:B, :n_entities]
    return out


class CPJax:
    """JAX/Pallas port of the CP KBC model (forward only, full-entity scoring path)."""

    def __init__(self, sizes, rank, init_size=0.001, key=jax.random.PRNGKey(0),
                 score_dtype=jnp.bfloat16, tb_max=256):
        self.sizes = sizes
        self.rank = rank
        self.score_dtype = score_dtype
        self.tb_max = tb_max

        k0, k1, k2 = jax.random.split(key, 3)
        # nn.Embedding default init is N(0,1); scaled by init_size as in the module.
        self.lhs_w = jax.random.normal(k0, (sizes[0], rank), jnp.float32) * init_size
        self.rel_w = jax.random.normal(k1, (sizes[1], rank), jnp.float32) * init_size
        self.rhs_w = jax.random.normal(k2, (sizes[2], rank), jnp.float32) * init_size

        # ---- scoring-path table: pre-transposed, reduced precision, padded ONCE ----
        elem = jnp.dtype(score_dtype).itemsize
        self.vmem_budget = _vmem_budget_bytes()
        self.tn = _choose_entity_tile(sizes[2], rank, tb_max,
                                      q_bytes=elem, rhs_bytes=elem, out_bytes=elem,
                                      vmem_budget_bytes=self.vmem_budget)
        n_pad = _round_up(sizes[2], self.tn)
        rhs_t = jnp.asarray(self.rhs_w.T, dtype=score_dtype)
        if n_pad != sizes[2]:
            rhs_t = jnp.pad(rhs_t, ((0, 0), (0, n_pad - sizes[2])))
        self.rhs_t = rhs_t
        # TODO(synk): optional fp8 (v7x) / int8 (v5e/v6e) rhs_t copy + per-table scale
        # for the scoring matmul, accuracy permitting (halves rhs HBM bytes again).

    def forward(self, x, p_hr=None, p_tr=None):
        # x: int32 [B, 3] triples (lhs_idx, rel_idx, rhs_idx)
        lhs = self.lhs_w[x[:, 0]]
        rel = self.rel_w[x[:, 1]]
        rhs = self.rhs_w[x[:, 2]]
        self_hr = lhs * rel
        self_tr = rhs * rel
        if p_hr is not None:
            h = self.lhs_w[p_hr[:, 0]]
            r = self.rel_w[p_hr[:, 1]]
            return self_hr, h * r
        if p_tr is not None:
            t = self.rhs_w[p_tr[:, 0]]
            r = self.rel_w[p_tr[:, 1]]
            return self_tr, t * r
        # Hadamard product hoisted out of the kernel (the grid is a sequential loop on
        # one TensorCore, so computing it per entity tile would redo B*R work).
        q = self_hr.astype(self.score_dtype)
        scores = cp_scores(q, self.rhs_t, n_entities=self.sizes[2], tn=self.tn,
                           tb_max=self.tb_max, out_dtype=self.score_dtype,
                           vmem_limit_bytes=self.vmem_budget)
        return scores, [(lhs, rel, rhs)]


if __name__ == "__main__":
    # Small synthetic problem: 300 entities (non-multiple of 128 to exercise the
    # ragged/init-padding path), 64 relations, rank 32, batch of 8 triples.
    n_entities, n_relations, rank, batch = 300, 64, 32, 8
    model = CPJax((n_entities, n_relations, n_entities), rank,
                  init_size=0.001, key=jax.random.PRNGKey(0))

    kq = jax.random.PRNGKey(42)
    k_l, k_r, k_t = jax.random.split(kq, 3)
    x = jnp.stack(
        [
            jax.random.randint(k_l, (batch,), 0, n_entities),
            jax.random.randint(k_r, (batch,), 0, n_relations),
            jax.random.randint(k_t, (batch,), 0, n_entities),
        ],
        axis=1,
    ).astype(jnp.int32)

    scores, factors = model.forward(x)
    scores = jax.block_until_ready(scores)
    assert scores.shape == (batch, n_entities)
    scores_f32 = scores.astype(jnp.float32)

    # Reference 1: identical bf16-quantized inputs, f32 accumulation (matches kernel path,
    # modulo the final bf16 output rounding).
    lhs = model.lhs_w[x[:, 0]]
    rel = model.rel_w[x[:, 1]]
    q_ref = (lhs * rel).astype(jnp.bfloat16).astype(jnp.float32)
    ref = q_ref @ model.rhs_t.astype(jnp.float32)[:, :n_entities]
    rel_err = jnp.max(jnp.abs(scores_f32 - ref)) / (jnp.max(jnp.abs(ref)) + 1e-30)
    assert rel_err < 1e-2, f"kernel mismatch vs bf16 reference: {rel_err}"

    # Reference 2: full-f32 computation — bound the bf16 drift on the scoring path.
    ref_f32 = (lhs * rel) @ model.rhs_w.T
    rel_err_f32 = jnp.max(jnp.abs(scores_f32 - ref_f32)) / (jnp.max(jnp.abs(ref_f32)) + 1e-30)
    assert rel_err_f32 < 5e-2, f"bf16 scoring drifted from f32 reference: {rel_err_f32}"

    # Extra check: force a multi-tile grid on BOTH axes (3 entity tiles x 2 batch tiles)
    # to exercise the swapped grid order / rhs reuse path.
    kb = jax.random.PRNGKey(7)
    q_big = jax.random.normal(kb, (24, rank), jnp.float32).astype(jnp.bfloat16)
    rhs_small = jnp.pad(jnp.asarray(model.rhs_w.T, jnp.bfloat16),
                        ((0, 0), (0, 384 - n_entities)))
    out_big = cp_scores(q_big, rhs_small, n_entities=n_entities, tn=128, tb_max=16,
                        out_dtype=jnp.bfloat16)
    out_big = jax.block_until_ready(out_big).astype(jnp.float32)
    ref_big = q_big.astype(jnp.float32) @ model.rhs_w.T.astype(jnp.float32)
    err_big = jnp.max(jnp.abs(out_big - ref_big)) / (jnp.max(jnp.abs(ref_big)) + 1e-30)
    assert err_big < 1e-2, f"multi-tile grid mismatch: {err_big}"

    print("KERNEL_OK")
</pallas_src>

<mosaic_0001>
module attributes {stable_mosaic.version = 11 : i64} {
  func.func @_cp_score_kernel(%arg0: i32, %arg1: i32, %arg2: memref<16x32xbf16, #tpu.memory_space<vmem>>, %arg3: memref<32x384xbf16, #tpu.memory_space<vmem>>, %arg4: memref<16x384xbf16, #tpu.memory_space<vmem>>) attributes {dimension_semantics = [#tpu.dimension_semantics<parallel>, #tpu.dimension_semantics<parallel>], iteration_bounds = array<i64: 1, 1>, scalar_prefetch = 0 : i64, scratch_operands = 0 : i64, tpu.core_type = #tpu.core_type<tc>, window_params = [{transform_indices = @transform_0, window_bounds = array<i64: 16, 32>}, {transform_indices = @transform_1, window_bounds = array<i64: 32, 384>}, {transform_indices = @transform_2, window_bounds = array<i64: 16, 384>}]} {
    %c0 = arith.constant 0 : index
    %c0_0 = arith.constant 0 : index
    %0 = vector.load %arg2[%c0, %c0_0] : memref<16x32xbf16, #tpu.memory_space<vmem>>, vector<16x32xbf16>
    %c0_1 = arith.constant 0 : index
    %c0_2 = arith.constant 0 : index
    %1 = vector.load %arg3[%c0_1, %c0_2] : memref<32x384xbf16, #tpu.memory_space<vmem>>, vector<32x384xbf16>
    %cst = arith.constant dense<0.000000e+00> : vector<16x384xf32>
    %2 = tpu.matmul %0, %1, %cst {dimension_numbers = #tpu.dot_dimension_numbers<[1], [0], [0], [1], [0, 0, 1, 1], [], []>} : vector<16x32xbf16>, vector<32x384xbf16>, vector<16x384xf32> -> vector<16x384xf32>
    %3 = arith.truncf %2 : vector<16x384xf32> to vector<16x384xbf16>
    %c0_3 = arith.constant 0 : index
    %c0_4 = arith.constant 0 : index
    %4 = vector.load %arg4[%c0_3, %c0_4] : memref<16x384xbf16, #tpu.memory_space<vmem>>, vector<16x384xbf16>
    tpu.vector_store %arg4[%c0_3, %c0_4], %3 {strides = array<i32>} : memref<16x384xbf16, #tpu.memory_space<vmem>>, vector<16x384xbf16>,
    return
  }
  func.func @transform_0(%arg0: i32, %arg1: i32) -> (i32, i32) {
    %c0_i32 = arith.constant 0 : i32
    %c0_i32_0 = arith.constant 0 : i32
    return %arg1, %c0_i32 : i32, i32
  }
  func.func @transform_1(%arg0: i32, %arg1: i32) -> (i32, i32) {
    %c0_i32 = arith.constant 0 : i32
    %c0_i32_0 = arith.constant 0 : i32
    return %c0_i32, %arg0 : i32, i32
  }
  func.func @transform_2(%arg0: i32, %arg1: i32) -> (i32, i32) {
    %c0_i32 = arith.constant 0 : i32
    return %arg1, %arg0 : i32, i32
  }
}

</mosaic_0001>

<llo_original>
// kernel: tpu_custom_call.1
$region0: #{tpu_custom_call.1}
  #allocation0 [shape = 'u32[]', space=smem, size = 0x4, offset = 0x4, fixed_abs, tag = 'smem constant byte address 0x4 - core index']
  #allocation1 [shape = 'u32[144,128]{1,0:T(1,128)}', space=vmem, size = 0x12000, scoped, tag = 'internal scratch']
  %s0 = inlined_call_operand.hbm [shape: bf16[16,32], index: 0, kind: input, shape index: {}]
  %s1 = inlined_call_operand.hbm [shape: bf16[32,384], index: 1, kind: input, shape index: {}]
  %s2 = inlined_call_operand.hbm [shape: bf16[16,384], index: 2, kind: output, shape index: {}]
  %s3 = sld [smem:[#allocation0]]
  $region26: #{tpu_custom_call.1} parent=0
    _
  %s5 = ssub.s32 1, %s3
  %s6 = scalar_select 0, %s5, %s3
  $region1: #{tpu_custom_call.1} parent=0
    #allocation2 [shape = 'u8[4096]{0}', space=vmem, size = 0x1000, scoped, tag = 'input window, operand 0, single buffered']
    #allocation3 [shape = 's32[1]{0}', space=sflag, size = 0x4, scoped, tag = 'scoped memory for tpu_custom_call.1']
    #allocation4 [shape = 's32[1]{0}', space=sflag, size = 0x4, scoped, tag = 'scoped memory for tpu_custom_call.1']
    #allocation5 [shape = 'u8[24576]{0}', space=vmem, size = 0x6000, scoped, tag = 'input window, operand 1, single buffered']
    #allocation6 [shape = 's32[1]{0}', space=sflag, size = 0x4, scoped, tag = 'scoped memory for tpu_custom_call.1']
    #allocation7 [shape = 'u8[12288]{0}', space=vmem, size = 0x3000, scoped, tag = 'output window, operand 0, single buffered']
    %7 = vsyncpa [#allocation3], 0
    %8 = vsyncpa [#allocation6], 0
    %9 = vsyncpa [#allocation4], 0
    // Predicated region
    $region2: #{tpu_custom_call.1} parent=1 // pred_check
      _
    $region3: #{tpu_custom_call.1} parent=1 // pred_check_branch
      %11 = sbr.rel (0) target = $region5
    $region4: #{tpu_custom_call.1} parent=1 // pred_region
      %s13 = ssub.s32 128, 128
      %14 = vsyncadd [#allocation3], %s13
      %s15 = sshll.u32 [#allocation2], 4
      %s16 = int_to_ptr.vmem [resolvable:$true] %s15
      %21 = dma.hbm_to_vmem [thread:$0]  %s0, 128, %s16, [#allocation3], 64, 64, 4
    $region5: #{tpu_custom_call.1} parent=1 // pred_fallthru
      _
    // Predicated region
    $region6: #{tpu_custom_call.1} parent=1 // pred_check
      _
    $region7: #{tpu_custom_call.1} parent=1 // pred_check_branch
      %23 = sbr.rel (0) target = $region9
    $region8: #{tpu_custom_call.1} parent=1 // pred_region
      %s25 = ssub.s32 768, 768
      %26 = vsyncadd [#allocation6], %s25
      %s27 = sshll.u32 [#allocation5], 4
      %s28 = int_to_ptr.vmem [resolvable:$true] %s27
      %33 = dma.hbm_to_vmem [thread:$0]  %s1, 768, %s28, [#allocation6], 192, 192, 12
    $region9: #{tpu_custom_call.1} parent=1 // pred_fallthru
      _
    // Predicated region
    $region10: #{tpu_custom_call.1} parent=1 // pred_check
      _
    $region11: #{tpu_custom_call.1} parent=1 // pred_check_branch
      %35 = sbr.rel (0) target = $region13
    $region12: #{tpu_custom_call.1} parent=1 // pred_region
      %36 = dma.done [#allocation3], 128
    $region13: #{tpu_custom_call.1} parent=1 // pred_fallthru
      _
    // Predicated region
    $region14: #{tpu_custom_call.1} parent=1 // pred_check
      _
    $region15: #{tpu_custom_call.1} parent=1 // pred_check_branch
      %38 = sbr.rel (0) target = $region17
    $region16: #{tpu_custom_call.1} parent=1 // pred_region
      %39 = dma.done [#allocation6], 768
    $region17: #{tpu_custom_call.1} parent=1 // pred_fallthru
      _
    %v41 = vld [vmem:[#allocation2] sm:$0xf]
    %v42 = vld [vmem:[#allocation2 + $0x4] sm:$0xf]
    %v43 = vld [vmem:[#allocation5] sm:$0xff]
    %v44 = vld [vmem:[#allocation5 + $0x8] sm:$0xf]
    %v45 = vld [vmem:[#allocation5 + $0xc] sm:$0xff]
    %v46 = vld [vmem:[#allocation5 + $0x14] sm:$0xf]
    %v47 = vld [vmem:[#allocation5 + $0x18] sm:$0xff]
    %v48 = vld [vmem:[#allocation5 + $0x20] sm:$0xf]
    %v49 = vld [vmem:[#allocation5 + $0x24] sm:$0xff]
    %v50 = vld [vmem:[#allocation5 + $0x2c] sm:$0xf]
    %v53 = vunpack.c.l.b16 %v41
    %v54 = vunpack.c.l.b16 %v42
    %v55 = vpack.c.b16 %v54, %v53
    %v64 = vunpack.c.l.b16 %v43
    %v65 = vunpack.c.h.b16 %v43
    %v66 = vunpack.c.l.b16 %v44
    %v67 = vunpack.c.l.b16 %v45
    %v68 = vunpack.c.h.b16 %v45
    %v69 = vunpack.c.l.b16 %v46
    %v70 = vunpack.c.l.b16 %v47
    %v71 = vunpack.c.h.b16 %v47
    %v72 = vunpack.c.l.b16 %v48
    %v73 = vunpack.c.l.b16 %v49
    %v74 = vunpack.c.h.b16 %v49
    %v75 = vunpack.c.l.b16 %v50
    %v76 = vpack.c.b16 %v67, %v64
    %v77 = vpack.c.b16 %v68, %v65
    %v78 = vpack.c.b16 %v69, %v66
    %v79 = vpack.c.b16 %v73, %v70
    %v80 = vpack.c.b16 %v74, %v71
    %v81 = vpack.c.b16 %v75, %v72
    %vm88 = vcmask 261120
    %v90 = vsel %vm88, %v55, 0
    %92 = vmatprep.subr.bf16.mxu0 %v77
    %93 = vmatpush1.bf16.msra.mxu0 %v76
    %94 = vmatprep.subr.bf16.mxu0 %v80
    %95 = vmatpush1.bf16.msra.mxu0 %v79
    %96 = vmatprep.subr.bf16.mxu0 0
    %97 = vmatpush1.bf16.msra.mxu0 0
    %98 = vmatprep.subr.bf16.mxu0 0
    %99 = vmatpush1.bf16.msra.mxu0 0
    %100 = vmatprep.subr.bf16.mxu0 0
    %101 = vmatpush1.bf16.msra.mxu0 0
    %102 = vmatprep.subr.bf16.mxu0 0
    %103 = vmatpush1.bf16.msra.mxu0 0
    %104 = vmatprep.subr.bf16.mxu0 0
    %105 = vmatpush1.bf16.msra.mxu0 0
    %106 = vmatprep.subr.bf16.mxu0 0
    %107 = vmatpush1.bf16.msra.mxu0 0
    %108 = vmatprep.subr.bf16.mxu0 0
    %109 = vmatpush1.bf16.msra.mxu0 0
    %110 = vmatprep.subr.bf16.mxu0 0
    %111 = vmatpush1.bf16.msra.mxu0 0
    %112 = vmatprep.subr.bf16.mxu0 0
    %113 = vmatpush1.bf16.msra.mxu0 0
    %114 = vmatprep.subr.bf16.mxu0 0
    %115 = vmatpush1.bf16.msra.mxu0 0
    %116 = vmatprep.subr.bf16.mxu0 0
    %117 = vmatpush1.bf16.msra.mxu0 0
    %118 = vmatprep.subr.bf16.mxu0 0
    %119 = vmatpush1.bf16.msra.mxu0 0
    %120 = vmatprep.subr.bf16.mxu0 0
    %121 = vmatpush1.bf16.msra.mxu0 0
    %122 = vmatprep.subr.bf16.mxu0 0
    %123 = vmatpush1.bf16.msra.mxu0 0
    %124 = vmatprep.mubr.bf16.mxu0 0
    %125 = vmatmul.mubr.bf16.gmra.mrb[0].mxu0 %v90
    %v126 = vpop.f32.mrb[0].mxu0
    %v127 = vadd.f32 0.0, %v126
    %v128 = vpop.f32.mrb[0].mxu0
    %v129 = vadd.f32 0.0, %v128
    %v130 = vpop.f32.mrb[0].mxu0
    %v131 = vadd.f32 0.0, %v130
    %v132 = vpop.f32.mrb[0].mxu0
    %v133 = vadd.f32 0.0, %v132
    %134 = vdwg.mxu0
    %135 = vmatprep.subr.bf16.mxu0 0
    %136 = vmatpush1.bf16.msra.mxu0 %v78
    %137 = vmatprep.subr.bf16.mxu0 0
    %138 = vmatpush1.bf16.msra.mxu0 %v81
    %139 = vmatprep.subr.bf16.mxu0 0
    %140 = vmatpush1.bf16.msra.mxu0 0
    %141 = vmatprep.subr.bf16.mxu0 0
    %142 = vmatpush1.bf16.msra.mxu0 0
    %143 = vmatprep.subr.bf16.mxu0 0
    %144 = vmatpush1.bf16.msra.mxu0 0
    %145 = vmatprep.subr.bf16.mxu0 0
    %146 = vmatpush1.bf16.msra.mxu0 0
    %147 = vmatprep.subr.bf16.mxu0 0
    %148 = vmatpush1.bf16.msra.mxu0 0
    %149 = vmatprep.subr.bf16.mxu0 0
    %150 = vmatpush1.bf16.msra.mxu0 0
    %151 = vmatprep.subr.bf16.mxu0 0
    %152 = vmatpush1.bf16.msra.mxu0 0
    %153 = vmatprep.subr.bf16.mxu0 0
    %154 = vmatpush1.bf16.msra.mxu0 0
    %155 = vmatprep.subr.bf16.mxu0 0
    %156 = vmatpush1.bf16.msra.mxu0 0
    %157 = vmatprep.subr.bf16.mxu0 0
    %158 = vmatpush1.bf16.msra.mxu0 0
    %159 = vmatprep.subr.bf16.mxu0 0
    %160 = vmatpush1.bf16.msra.mxu0 0
    %161 = vmatprep.subr.bf16.mxu0 0
    %162 = vmatpush1.bf16.msra.mxu0 0
    %163 = vmatprep.subr.bf16.mxu0 0
    %164 = vmatpush1.bf16.msra.mxu0 0
    %165 = vmatprep.subr.bf16.mxu0 0
    %166 = vmatpush1.bf16.msra.mxu0 0
    %167 = vmatprep.mubr.bf16.mxu0 0
    %168 = vmatmul.mubr.bf16.gmra.mrb[0].mxu0 %v90
    %v169 = vpop.f32.mrb[0].mxu0
    %v170 = vadd.f32 0.0, %v169
    %v171 = vpop.f32.mrb[0].mxu0
    %v172 = vpop.f32.mrb[0].mxu0
    %v173 = vadd.f32 0.0, %v172
    %v174 = vpop.f32.mrb[0].mxu0
    %175 = vdwg.mxu0
    %v176 = vpack.c.bf16 %v131, %v127
    %v177 = vpack.c.bf16 %v133, %v129
    %v178 = vpack.c.bf16 %v173, %v170
    %v182 = vunpack.c.l.b16 %v176
    %v183 = vunpack.c.l.b16 %v177
    %v184 = vunpack.c.l.b16 %v178
    %v185 = vunpack.c.h.b16 %v176
    %v186 = vunpack.c.h.b16 %v177
    %v187 = vunpack.c.h.b16 %v178
    %v188 = vpack.c.b16 %v183, %v182
    %v189 = vpack.c.b16 %v184, %v184
    %v190 = vpack.c.b16 %v186, %v185
    %v191 = vpack.c.b16 %v187, %v187
    %196 = vst [vmem:[#allocation7] sm:$0xff] %v188
    %197 = vst [vmem:[#allocation7 + $0x8] sm:$0xf] %v189
    %198 = vst [vmem:[#allocation7 + $0xc] sm:$0xff] %v190
    %199 = vst [vmem:[#allocation7 + $0x14] sm:$0xf] %v191
    // Predicated region
    $region18: #{tpu_custom_call.1} parent=1 // pred_check
      _
    $region19: #{tpu_custom_call.1} parent=1 // pred_check_branch
      %201 = sbr.rel (0) target = $region21
    $region20: #{tpu_custom_call.1} parent=1 // pred_region
      %s203 = ssub.s32 384, 384
      %204 = vsyncadd [#allocation4], %s203
      %s205 = sshll.u32 [#allocation7], 4
      %s206 = int_to_ptr.vmem [resolvable:$true] %s205
      %211 = dma.vmem_to_hbm [thread:$0]  %s206, 384, %s2, [#allocation4], 192, 192, 12
    $region21: #{tpu_custom_call.1} parent=1 // pred_fallthru
      _
    // Predicated region
    $region22: #{tpu_custom_call.1} parent=1 // pred_check
      _
    $region23: #{tpu_custom_call.1} parent=1 // pred_check_branch
      %213 = sbr.rel (0) target = $region25
    $region24: #{tpu_custom_call.1} parent=1 // pred_region
      %214 = dma.done [#allocation4], 384
    $region25: #{tpu_custom_call.1} parent=1 // pred_fallthru
      _
    %215 = vsyncpa [#allocation3], 1
    %216 = vsyncpa [#allocation6], 1
    %217 = vsyncpa [#allocation4], 1

</llo_original>
